<compile_context>
chip_gen: v7x
topology: tpu7x:2x2x1
jax: 0.10.0
libtpu: 0.0.40
codegen_flags: <defaults>
</compile_context>

<pallas_src>
import functools

import jax
import jax.numpy as jnp
from jax.experimental import pallas as pl
from jax.experimental.pallas import tpu as pltpu


def _head_kernel(x_ref, w_ref, b_ref, wo_ref, bo_ref, o_ref, x_acc):
    """One grid step == one hidden->hidden layer.

    x_ref : [Bp, H]   f32   CLS-token features (padded batch, resident)
    w_ref : [1, H, H] bf16  this layer's weight ([in, out] convention)
    b_ref : [1, 1, H] f32   this layer's bias
    wo_ref: [H, Cp]   bf16  out_proj weight ([in, out], lane-padded)
    bo_ref: [1, Cp]   f32   out_proj bias (lane-padded)
    o_ref : [Bp, Cp]  f32   logits (padded)
    x_acc : [Bp, H]   f32   VMEM scratch carrying the activation across layers
    """
    l = pl.program_id(0)
    last = pl.num_programs(0) - 1

    # First layer: load the CLS activations into the resident accumulator.
    @pl.when(l == 0)
    def _():
        x_acc[...] = x_ref[...].astype(jnp.float32)

    # dropout(x) == x in eval mode.
    # bf16 MXU matmul with f32 accumulation; activation kept in f32.
    h = jnp.dot(
        x_acc[...].astype(jnp.bfloat16),
        w_ref[0],
        preferred_element_type=jnp.float32,
    )
    x_acc[...] = jnp.tanh(h + b_ref[0])

    # Last layer: apply out_proj and emit the (lane-dense) logits block.
    @pl.when(l == last)
    def _():
        logits = jnp.dot(
            x_acc[...].astype(jnp.bfloat16),
            wo_ref[...],
            preferred_element_type=jnp.float32,
        ) + bo_ref[...]
        o_ref[...] = logits.astype(o_ref.dtype)


def prepare_roberta_sc_head_params(linear_weights, linear_biases, out_w, out_b):
    """ONE-TIME parameter preparation (call once per model, NOT per forward).

    linear_weights: [L, H, H]  (x @ W convention, i.e. PyTorch weight.T)
    linear_biases:  [L, H]
    out_w: [H, C] (PyTorch weight.T), out_b: [C]

    Returns a tuple of device arrays (bf16 weights, f32 biases, lane-padded
    out_proj) to pass to roberta_sc_head_apply.
    """
    L, H, _ = linear_weights.shape
    C = out_w.shape[1]
    C_pad = ((C + 127) // 128) * 128

    w_bf16 = jnp.asarray(linear_weights, jnp.bfloat16)                   # [L,H,H]
    b_f32 = jnp.asarray(linear_biases, jnp.float32).reshape(L, 1, H)     # [L,1,H]
    wo_bf16 = jnp.pad(jnp.asarray(out_w, jnp.float32),
                      ((0, 0), (0, C_pad - C))).astype(jnp.bfloat16)     # [H,Cp]
    bo_f32 = jnp.pad(jnp.asarray(out_b, jnp.float32),
                     (0, C_pad - C)).reshape(1, C_pad)                   # [1,Cp]
    return (w_bf16, b_f32, wo_bf16, bo_f32)


@functools.partial(jax.jit, static_argnames=("num_labels",))
def roberta_sc_head_apply(features, params, *, num_labels):
    """features: [B, S, H] f32; params from prepare_roberta_sc_head_params.
    Returns logits: [B, num_labels] f32.

    Note: if multiple requests hit this head, batch them into one call --
    arithmetic intensity grows linearly with batch against the same weight DMA.
    """
    w_bf16, b_f32, wo_bf16, bo_f32 = params
    B, S, H = features.shape
    L = w_bf16.shape[0]
    C_pad = wo_bf16.shape[1]
    assert L >= 1, "output_nlayers must be >= 1 for this kernel"

    # Sublane-align the batch (label dim was lane-aligned at prepare time).
    B_pad = ((B + 7) // 8) * 8

    # Glue kept minimal: CLS slice + one pad.
    x_cls = features[:, 0, :].astype(jnp.float32)                 # [B, H]
    x_pad = jnp.pad(x_cls, ((0, B_pad - B), (0, 0)))              # [Bp, H]

    # Deepen the weight pipeline when there are enough layers to benefit.
    n_wbuf = 3 if L >= 3 else 2
    if L >= 3:
        w_spec = pl.BlockSpec((1, H, H), lambda l: (l, 0, 0),
                              pipeline_mode=pl.Buffered(3))
    else:
        w_spec = pl.BlockSpec((1, H, H), lambda l: (l, 0, 0))

    # Right-size the VMEM request from actual usage (+50% headroom), so this
    # tiny head does not reserve 32 MiB on v7x's 64 MiB VMEM.
    vmem_bytes = (
        n_wbuf * H * H * 2          # pipelined bf16 layer-weight blocks
        + n_wbuf * 1 * H * 4        # bias blocks
        + 2 * B_pad * H * 4         # x input (double-buffered)
        + 2 * H * C_pad * 2         # out_proj weight
        + 2 * C_pad * 4             # out_proj bias
        + 2 * B_pad * C_pad * 4     # logits out
        + B_pad * H * 4             # activation accumulator scratch
    )
    vmem_limit = min(max(int(vmem_bytes * 3 // 2), 2 * 1024 * 1024),
                     48 * 1024 * 1024)

    # Advisory cost estimate so XLA can overlap this head with encoder work.
    cost = pl.CostEstimate(
        flops=2 * B_pad * H * H * L + 2 * B_pad * H * C_pad,
        transcendentals=B_pad * H * L,
        bytes_accessed=(
            B_pad * H * 4              # x in
            + L * H * H * 2            # bf16 layer weights
            + L * H * 4                # biases
            + H * C_pad * 2            # bf16 out_proj weight
            + C_pad * 4                # out_proj bias
            + B_pad * C_pad * 4        # logits out
        ),
    )

    out_pad = pl.pallas_call(
        _head_kernel,
        out_shape=jax.ShapeDtypeStruct((B_pad, C_pad), jnp.float32),
        grid_spec=pltpu.PrefetchScalarGridSpec(
            num_scalar_prefetch=0,
            grid=(L,),
            in_specs=[
                pl.BlockSpec((B_pad, H), lambda l: (0, 0)),     # x (resident)
                w_spec,                                         # per-layer W
                pl.BlockSpec((1, 1, H), lambda l: (l, 0, 0)),   # per-layer b
                pl.BlockSpec((H, C_pad), lambda l: (0, 0)),     # out_proj W
                pl.BlockSpec((1, C_pad), lambda l: (0, 0)),     # out_proj b
            ],
            out_specs=pl.BlockSpec((B_pad, C_pad), lambda l: (0, 0)),
            scratch_shapes=[pltpu.VMEM((B_pad, H), jnp.float32)],
        ),
        compiler_params=pltpu.CompilerParams(
            # Layer axis is a sequential recurrence -> arbitrary.
            dimension_semantics=("arbitrary",),
            vmem_limit_bytes=vmem_limit,
        ),
        cost_estimate=cost,
    )(x_pad, w_bf16, b_f32, wo_bf16, bo_f32)

    return out_pad[:B, :num_labels]


def roberta_sc_head(features, linear_weights, linear_biases, out_w, out_b):
    """One-shot convenience wrapper.  In a serving loop prefer calling
    prepare_roberta_sc_head_params once and roberta_sc_head_apply per batch."""
    params = prepare_roberta_sc_head_params(
        linear_weights, linear_biases, out_w, out_b)
    return roberta_sc_head_apply(features, params, num_labels=out_w.shape[1])


def _reference_matched(features, w_bf16, biases, out_w_bf16, out_b):
    """Reference with the same dtype path as the kernel (bf16 MXU, f32 accum)."""
    x = features[:, 0, :].astype(jnp.float32)
    for l in range(w_bf16.shape[0]):
        x = jnp.tanh(
            jnp.dot(x.astype(jnp.bfloat16), w_bf16[l],
                    preferred_element_type=jnp.float32)
            + biases[l].astype(jnp.float32)
        )
    return (
        jnp.dot(x.astype(jnp.bfloat16), out_w_bf16,
                preferred_element_type=jnp.float32)
        + out_b.astype(jnp.float32)
    )


def _reference_f32(features, linear_weights, linear_biases, out_w, out_b):
    x = features[:, 0, :]
    for l in range(linear_weights.shape[0]):
        x = jnp.tanh(x @ linear_weights[l] + linear_biases[l])
    return x @ out_w + out_b


if __name__ == "__main__":
    # Small synthetic config: batch=2, seq=8, hidden=32, output_nlayers=2, num_labels=4
    B, S, H = 2, 8, 32
    L, C = 2, 4

    key = jax.random.PRNGKey(0)
    k_feat, k_w, k_b, k_ow, k_ob = jax.random.split(key, 5)

    features = jax.random.normal(k_feat, (B, S, H), dtype=jnp.float32)

    # PyTorch Linear shapes are weight [out, in]; stored pre-transposed [in, out].
    scale = 1.0 / jnp.sqrt(jnp.float32(H))
    linear_weights = jax.random.uniform(k_w, (L, H, H), jnp.float32, -scale, scale)
    linear_biases = jax.random.uniform(k_b, (L, H), jnp.float32, -scale, scale)
    out_w = jax.random.uniform(k_ow, (H, C), jnp.float32, -scale, scale)
    out_b = jax.random.uniform(k_ob, (C,), jnp.float32, -scale, scale)

    # Prepare once (hoisted bf16 cast + padding), then run the jitted apply.
    params = prepare_roberta_sc_head_params(
        linear_weights, linear_biases, out_w, out_b)
    logits = roberta_sc_head_apply(features, params, num_labels=C)
    logits = jax.block_until_ready(logits)
    assert logits.shape == (B, C)

    # Tight check against a dtype-matched (bf16-weight) reference.
    ref_matched = _reference_matched(
        features,
        linear_weights.astype(jnp.bfloat16),
        linear_biases,
        out_w.astype(jnp.bfloat16),
        out_b,
    )
    assert jnp.allclose(logits, ref_matched, atol=2e-4, rtol=2e-4), (
        f"mismatch vs matched ref: max abs err "
        f"{jnp.max(jnp.abs(logits - ref_matched))}"
    )

    # Loose sanity check against the pure-f32 reference (bf16 weight quant noise).
    ref_f32 = _reference_f32(features, linear_weights, linear_biases, out_w, out_b)
    assert jnp.allclose(logits, ref_f32, atol=5e-2, rtol=5e-2), (
        f"mismatch vs f32 ref: max abs err {jnp.max(jnp.abs(logits - ref_f32))}"
    )

    print("KERNEL_OK")
</pallas_src>

<mosaic_0001>
module attributes {stable_mosaic.version = 11 : i64} {
  func.func @_head_kernel(%arg0: i32, %arg1: memref<8x32xf32, #tpu.memory_space<vmem>>, %arg2: memref<1x32x32xbf16, #tpu.memory_space<vmem>>, %arg3: memref<1x1x32xf32, #tpu.memory_space<vmem>>, %arg4: memref<32x128xbf16, #tpu.memory_space<vmem>>, %arg5: memref<1x128xf32, #tpu.memory_space<vmem>>, %arg6: memref<8x128xf32, #tpu.memory_space<vmem>>, %arg7: memref<8x32xf32, #tpu.memory_space<vmem>>) attributes {dimension_semantics = [#tpu.dimension_semantics<arbitrary>], iteration_bounds = array<i64: 2>, scalar_prefetch = 0 : i64, scratch_operands = 1 : i64, tpu.core_type = #tpu.core_type<tc>, window_params = [{pipeline_mode = #tpu.pipeline_mode<synchronous>, transform_indices = @transform_0, window_bounds = array<i64: 8, 32>}, {transform_indices = @transform_1, window_bounds = array<i64: 1, 32, 32>}, {transform_indices = @transform_2, window_bounds = array<i64: 1, 1, 32>}, {pipeline_mode = #tpu.pipeline_mode<synchronous>, transform_indices = @transform_3, window_bounds = array<i64: 32, 128>}, {pipeline_mode = #tpu.pipeline_mode<synchronous>, transform_indices = @transform_4, window_bounds = array<i64: 1, 128>}, {pipeline_mode = #tpu.pipeline_mode<synchronous>, transform_indices = @transform_5, window_bounds = array<i64: 8, 128>}]} {
    %c0_i32 = arith.constant 0 : i32
    %0 = arith.cmpi eq, %arg0, %c0_i32 : i32
    %1 = arith.extui %0 : i1 to i32
    %c0_i32_0 = arith.constant 0 : i32
    %2 = arith.cmpi ne, %1, %c0_i32_0 : i32
    scf.if %2 {
      %c0_11 = arith.constant 0 : index
      %c0_12 = arith.constant 0 : index
      %17 = vector.load %arg1[%c0_11, %c0_12] : memref<8x32xf32, #tpu.memory_space<vmem>>, vector<8x32xf32>
      %c0_13 = arith.constant 0 : index
      %c0_14 = arith.constant 0 : index
      %18 = vector.load %arg7[%c0_13, %c0_14] : memref<8x32xf32, #tpu.memory_space<vmem>>, vector<8x32xf32>
      tpu.vector_store %arg7[%c0_13, %c0_14], %17 {strides = array<i32>} : memref<8x32xf32, #tpu.memory_space<vmem>>, vector<8x32xf32>,
    } else {
    }
    %c0 = arith.constant 0 : index
    %c0_1 = arith.constant 0 : index
    %3 = vector.load %arg7[%c0, %c0_1] : memref<8x32xf32, #tpu.memory_space<vmem>>, vector<8x32xf32>
    %4 = arith.truncf %3 : vector<8x32xf32> to vector<8x32xbf16>
    %c0_2 = arith.constant 0 : index
    %c0_3 = arith.constant 0 : index
    %c0_4 = arith.constant 0 : index
    %5 = vector.load %arg2[%c0_2, %c0_3, %c0_4] : memref<1x32x32xbf16, #tpu.memory_space<vmem>>, vector<1x32x32xbf16>
    %6 = vector.shape_cast %5 : vector<1x32x32xbf16> to vector<32x32xbf16>
    %cst = arith.constant dense<0.000000e+00> : vector<8x32xf32>
    %7 = tpu.matmul %4, %6, %cst {dimension_numbers = #tpu.dot_dimension_numbers<[1], [0], [0], [1], [0, 0, 1, 1], [], []>} : vector<8x32xbf16>, vector<32x32xbf16>, vector<8x32xf32> -> vector<8x32xf32>
    %c0_5 = arith.constant 0 : index
    %c0_6 = arith.constant 0 : index
    %c0_7 = arith.constant 0 : index
    %8 = vector.load %arg3[%c0_5, %c0_6, %c0_7] : memref<1x1x32xf32, #tpu.memory_space<vmem>>, vector<1x1x32xf32>
    %9 = vector.shape_cast %8 : vector<1x1x32xf32> to vector<1x32xf32>
    %10 = vector.broadcast %9 : vector<1x32xf32> to vector<8x32xf32>
    %11 = arith.addf %7, %10 : vector<8x32xf32>
    %12 = math.tanh %11 : vector<8x32xf32>
    %c0_8 = arith.constant 0 : index
    %c0_9 = arith.constant 0 : index
    %13 = vector.load %arg7[%c0_8, %c0_9] : memref<8x32xf32, #tpu.memory_space<vmem>>, vector<8x32xf32>
    tpu.vector_store %arg7[%c0_8, %c0_9], %12 {strides = array<i32>} : memref<8x32xf32, #tpu.memory_space<vmem>>, vector<8x32xf32>,
    %c1_i32 = arith.constant 1 : i32
    %14 = arith.cmpi eq, %arg0, %c1_i32 : i32
    %15 = arith.extui %14 : i1 to i32
    %c0_i32_10 = arith.constant 0 : i32
    %16 = arith.cmpi ne, %15, %c0_i32_10 : i32
    scf.if %16 {
      %c0_11 = arith.constant 0 : index
      %c0_12 = arith.constant 0 : index
      %17 = vector.load %arg7[%c0_11, %c0_12] : memref<8x32xf32, #tpu.memory_space<vmem>>, vector<8x32xf32>
      %18 = arith.truncf %17 : vector<8x32xf32> to vector<8x32xbf16>
      %c0_13 = arith.constant 0 : index
      %c0_14 = arith.constant 0 : index
      %19 = vector.load %arg4[%c0_13, %c0_14] : memref<32x128xbf16, #tpu.memory_space<vmem>>, vector<32x128xbf16>
      %cst_15 = arith.constant dense<0.000000e+00> : vector<8x128xf32>
      %20 = tpu.matmul %18, %19, %cst_15 {dimension_numbers = #tpu.dot_dimension_numbers<[1], [0], [0], [1], [0, 0, 1, 1], [], []>} : vector<8x32xbf16>, vector<32x128xbf16>, vector<8x128xf32> -> vector<8x128xf32>
      %c0_16 = arith.constant 0 : index
      %c0_17 = arith.constant 0 : index
      %21 = vector.load %arg5[%c0_16, %c0_17] : memref<1x128xf32, #tpu.memory_space<vmem>>, vector<1x128xf32>
      %22 = vector.broadcast %21 : vector<1x128xf32> to vector<8x128xf32>
      %23 = arith.addf %20, %22 : vector<8x128xf32>
      %c0_18 = arith.constant 0 : index
      %c0_19 = arith.constant 0 : index
      %24 = vector.load %arg6[%c0_18, %c0_19] : memref<8x128xf32, #tpu.memory_space<vmem>>, vector<8x128xf32>
      tpu.vector_store %arg6[%c0_18, %c0_19], %23 {strides = array<i32>} : memref<8x128xf32, #tpu.memory_space<vmem>>, vector<8x128xf32>,
    } else {
    }
    return
  }
  func.func @transform_0(%arg0: i32) -> (i32, i32) {
    %c0_i32 = arith.constant 0 : i32
    %c0_i32_0 = arith.constant 0 : i32
    %c0_i32_1 = arith.constant 0 : i32
    return %c0_i32, %c0_i32_0 : i32, i32
  }
  func.func @transform_1(%arg0: i32) -> (i32, i32, i32) {
    %c0_i32 = arith.constant 0 : i32
    %c0_i32_0 = arith.constant 0 : i32
    %c0_i32_1 = arith.constant 0 : i32
    return %arg0, %c0_i32, %c0_i32_0 : i32, i32, i32
  }
  func.func @transform_2(%arg0: i32) -> (i32, i32, i32) {
    %c0_i32 = arith.constant 0 : i32
    %c0_i32_0 = arith.constant 0 : i32
    %c0_i32_1 = arith.constant 0 : i32
    return %arg0, %c0_i32, %c0_i32_0 : i32, i32, i32
  }
  func.func @transform_3(%arg0: i32) -> (i32, i32) {
    %c0_i32 = arith.constant 0 : i32
    %c0_i32_0 = arith.constant 0 : i32
    %c0_i32_1 = arith.constant 0 : i32
    return %c0_i32, %c0_i32_0 : i32, i32
  }
  func.func @transform_4(%arg0: i32) -> (i32, i32) {
    %c0_i32 = arith.constant 0 : i32
    %c0_i32_0 = arith.constant 0 : i32
    %c0_i32_1 = arith.constant 0 : i32
    return %c0_i32, %c0_i32_0 : i32, i32
  }
  func.func @transform_5(%arg0: i32) -> (i32, i32) {
    %c0_i32 = arith.constant 0 : i32
    %c0_i32_0 = arith.constant 0 : i32
    %c0_i32_1 = arith.constant 0 : i32
    return %c0_i32, %c0_i32_0 : i32, i32
  }
}

</mosaic_0001>

<llo_original>
// kernel: roberta_sc_head_apply.1
$region0: #{roberta_sc_head_apply.1}
  #allocation0 [shape = 'u32[]', space=smem, size = 0x4, offset = 0x4, fixed_abs, tag = 'smem constant byte address 0x4 - core index']
  #allocation1 [shape = 'u32[144,128]{1,0:T(1,128)}', space=vmem, size = 0x12000, scoped, tag = 'internal scratch']
  #allocation2 [shape = 'f32[8,32]{1,0:T(8,128)}', space=vmem, size = 0x1000, scoped, tag = 'scratch operand']
  %s0 = inlined_call_operand.vmem [shape: f32[8,32], index: 0, kind: input, shape index: {}]
  %s1 = inlined_call_operand.hbm [shape: bf16[2,32,32], index: 1, kind: input, shape index: {}]
  %s2 = inlined_call_operand.vmem [shape: f32[2,1,32], index: 2, kind: input, shape index: {}]
  %s3 = inlined_call_operand.vmem [shape: bf16[32,128], index: 3, kind: input, shape index: {}]
  %s4 = inlined_call_operand.vmem [shape: f32[1,128], index: 4, kind: input, shape index: {}]
  %s5 = inlined_call_operand.vmem [shape: f32[8,128], index: 5, kind: output, shape index: {}]
  %s6 = sld [smem:[#allocation0]]
  $region65: #{roberta_sc_head_apply.1} parent=0
    _
  %s8 = ssub.s32 1, %s6
  %s9 = scalar_select 0, %s8, %s6
  $region1: #{roberta_sc_head_apply.1} parent=0
    #allocation3 [shape = 'u8[16384]{0}', space=vmem, size = 0x4000, scoped, tag = 'input window, operand 1']
    #allocation4 [shape = 's32[2]{0}', space=sflag, size = 0x8, scoped, tag = 'scoped memory for roberta_sc_head_apply.1']
    %10 = vsyncpa [#allocation4], 0
    %s11 = scalar_lea.sflag [#allocation4], 1
    %12 = vsyncpa %s11, 0
    loop: start=0, step=1, limit=4
    $region2: #{roberta_sc_head_apply.1} parent=1 // loop_pre_header
      _
    $region3: #{roberta_sc_head_apply.1} parent=1 // loop_header
      %s14 = sphi 0, %s18
      %p15 = scmp.ge.s32.totalorder %s14, 4
      %s22 = sphi 0, %s22
      %s24 = sphi 0, %s22
      %s25 = sphi 0, %s24
      %s39 = sphi 0, %s25
      %s45 = sphi 0, %s47
      %s48 = sphi 0, %s45
      %s49 = sphi 0, %s48
      %s65 = sphi 0, %s49
      %s71 = sphi 0, %s73
      %s74 = sphi 0, %s71
      %s75 = sphi 0, %s74
      %s91 = sphi 0, %s75
      %s95 = sphi 0, %s95
      %s97 = sphi 0, %s95
      %s98 = sphi 0, %s97
      %s112 = sphi 0, %s98
      %s116 = sphi 0, %s116
      %s118 = sphi 0, %s116
      %s119 = sphi 0, %s118
      %s133 = sphi 0, %s119
      %s137 = sphi 0, %s137
      %s139 = sphi 0, %s137
      %s140 = sphi 0, %s139
      %s154 = sphi 0, %s140
    $region4: #{roberta_sc_head_apply.1} parent=1 // loop_header_branch
      %17 = sbr.rel (%p15) target = $region8
    $region5: #{roberta_sc_head_apply.1} parent=1 // loop_body
      %s19 = ssub.s32 %s14, 1
      %s20 = ssub.s32 %s14, 2
      %s21 = sadd.s32 %s14, 1
      %s23 = sadd.s32 %s22, 1
      %p26 = scmp.eq.s32.totalorder %s14, 1
      %p27 = scmp.ne.s32.totalorder %s22, %s24
      %p28 = scmp.eq.s32.totalorder %s14, 0
      %p29 = por %p27, %p28
      %p30 = scmp.ne.s32.totalorder %s22, %s24
      %p31 = scmp.eq.s32.totalorder %s19, 1
      %p32 = por %p30, %p31
      %p33 = scmp.ne.s32.totalorder %s24, %s25
      %p34 = scmp.eq.s32.totalorder %s19, 0
      %p35 = por %p33, %p34
      %p36 = scmp.ne.s32.totalorder %s24, %s25
      %p37 = scmp.eq.s32.totalorder %s20, 1
      %p38 = por %p36, %p37
      %p40 = scmp.ne.s32.totalorder %s25, %s39
      %p41 = scmp.eq.s32.totalorder %s20, 0
      %p42 = por %p40, %p41
      %s43 = ssub.s32 %s14, %s21
      %p44 = scmp.eq.s32.totalorder %s43, 0
      %s46 = sadd.s32 %s45, 1
      %s47 = scalar_select %p44, %s45, %s46
      %p50 = pneg %p44
      %p51 = scmp.eq.s32.totalorder %s14, 1
      %p52 = por %p50, %p51
      %p53 = scmp.ne.s32.totalorder %s45, %s48
      %p54 = scmp.eq.s32.totalorder %s14, 0
      %p55 = por %p53, %p54
      %p56 = scmp.ne.s32.totalorder %s45, %s48
      %p57 = scmp.eq.s32.totalorder %s19, 1
      %p58 = por %p56, %p57
      %p59 = scmp.ne.s32.totalorder %s48, %s49
      %p60 = scmp.eq.s32.totalorder %s19, 0
      %p61 = por %p59, %p60
      %p62 = scmp.ne.s32.totalorder %s48, %s49
      %p63 = scmp.eq.s32.totalorder %s20, 1
      %p64 = por %p62, %p63
      %p66 = scmp.ne.s32.totalorder %s49, %s65
      %p67 = scmp.eq.s32.totalorder %s20, 0
      %p68 = por %p66, %p67
      %s69 = ssub.s32 %s14, %s21
      %p70 = scmp.eq.s32.totalorder %s69, 0
      %s72 = sadd.s32 %s71, 1
      %s73 = scalar_select %p70, %s71, %s72
      %p76 = pneg %p70
      %p77 = scmp.eq.s32.totalorder %s14, 1
      %p78 = por %p76, %p77
      %p79 = scmp.ne.s32.totalorder %s71, %s74
      %p80 = scmp.eq.s32.totalorder %s14, 0
      %p81 = por %p79, %p80
      %p82 = scmp.ne.s32.totalorder %s71, %s74
      %p83 = scmp.eq.s32.totalorder %s19, 1
      %p84 = por %p82, %p83
      %p85 = scmp.ne.s32.totalorder %s74, %s75
      %p86 = scmp.eq.s32.totalorder %s19, 0
      %p87 = por %p85, %p86
      %p88 = scmp.ne.s32.totalorder %s74, %s75
      %p89 = scmp.eq.s32.totalorder %s20, 1
      %p90 = por %p88, %p89
      %p92 = scmp.ne.s32.totalorder %s75, %s91
      %p93 = scmp.eq.s32.totalorder %s20, 0
      %p94 = por %p92, %p93
      %s96 = sadd.s32 %s95, 1
      %p99 = scmp.eq.s32.totalorder %s14, 1
      %p100 = scmp.ne.s32.totalorder %s95, %s97
      %p101 = scmp.eq.s32.totalorder %s14, 0
      %p102 = por %p100, %p101
      %p103 = scmp.ne.s32.totalorder %s95, %s97
      %p104 = scmp.eq.s32.totalorder %s19, 1
      %p105 = por %p103, %p104
      %p106 = scmp.ne.s32.totalorder %s97, %s98
      %p107 = scmp.eq.s32.totalorder %s19, 0
      %p108 = por %p106, %p107
      %p109 = scmp.ne.s32.totalorder %s97, %s98
      %p110 = scmp.eq.s32.totalorder %s20, 1
      %p111 = por %p109, %p110
      %p113 = scmp.ne.s32.totalorder %s98, %s112
      %p114 = scmp.eq.s32.totalorder %s20, 0
      %p115 = por %p113, %p114
      %s117 = sadd.s32 %s116, 1
      %p120 = scmp.eq.s32.totalorder %s14, 1
      %p121 = scmp.ne.s32.totalorder %s116, %s118
      %p122 = scmp.eq.s32.totalorder %s14, 0
      %p123 = por %p121, %p122
      %p124 = scmp.ne.s32.totalorder %s116, %s118
      %p125 = scmp.eq.s32.totalorder %s19, 1
      %p126 = por %p124, %p125
      %p127 = scmp.ne.s32.totalorder %s118, %s119
      %p128 = scmp.eq.s32.totalorder %s19, 0
      %p129 = por %p127, %p128
      %p130 = scmp.ne.s32.totalorder %s118, %s119
      %p131 = scmp.eq.s32.totalorder %s20, 1
      %p132 = por %p130, %p131
      %p134 = scmp.ne.s32.totalorder %s119, %s133
      %p135 = scmp.eq.s32.totalorder %s20, 0
      %p136 = por %p134, %p135
      %s138 = sadd.s32 %s137, 1
      %p141 = scmp.eq.s32.totalorder %s14, 1
      %p142 = scmp.ne.s32.totalorder %s137, %s139
      %p143 = scmp.eq.s32.totalorder %s14, 0
      %p144 = por %p142, %p143
      %p145 = scmp.ne.s32.totalorder %s137, %s139
      %p146 = scmp.eq.s32.totalorder %s19, 1
      %p147 = por %p145, %p146
      %p148 = scmp.ne.s32.totalorder %s139, %s140
      %p149 = scmp.eq.s32.totalorder %s19, 0
      %p150 = por %p148, %p149
      %p151 = scmp.ne.s32.totalorder %s139, %s140
      %p152 = scmp.eq.s32.totalorder %s20, 1
      %p153 = por %p151, %p152
      %p155 = scmp.ne.s32.totalorder %s140, %s154
      %p156 = scmp.eq.s32.totalorder %s20, 0
      %p157 = por %p155, %p156
      %p158 = scmp.le.s32.totalorder 1, %s14
      %p159 = scmp.lt.s32.totalorder %s14, 3
      %p160 = pnand %p158, %p159
      %p161 = pneg %p160
      // Predicated region
      $region9: #{roberta_sc_head_apply.1} parent=5 // pred_check
        _
      $region10: #{roberta_sc_head_apply.1} parent=5 // pred_check_branch
        %163 = sbr.rel (%p160) target = $region12
      $region11: #{roberta_sc_head_apply.1} parent=5 // pred_region
        %s164 = ssub.s32 %s14, 1
        // Predicated region
        $region13: #{roberta_sc_head_apply.1} parent=11 // pred_check
          %p165 = pneg %p35
        $region14: #{roberta_sc_head_apply.1} parent=11 // pred_check_branch
          %167 = sbr.rel (%p165) target = $region16
        $region15: #{roberta_sc_head_apply.1} parent=11 // pred_region
          _
        $region16: #{roberta_sc_head_apply.1} parent=11 // pred_fallthru
          _
        // Predicated region
        $region17: #{roberta_sc_head_apply.1} parent=11 // pred_check
          %p168 = pneg %p108
        $region18: #{roberta_sc_head_apply.1} parent=11 // pred_check_branch
          %170 = sbr.rel (%p168) target = $region20
        $region19: #{roberta_sc_head_apply.1} parent=11 // pred_region
          _
        $region20: #{roberta_sc_head_apply.1} parent=11 // pred_fallthru
          _
        // Predicated region
        $region21: #{roberta_sc_head_apply.1} parent=11 // pred_check
          %p171 = pneg %p129
        $region22: #{roberta_sc_head_apply.1} parent=11 // pred_check_branch
          %173 = sbr.rel (%p171) target = $region24
        $region23: #{roberta_sc_head_apply.1} parent=11 // pred_region
          _
        $region24: #{roberta_sc_head_apply.1} parent=11 // pred_fallthru
          _
      $region12: #{roberta_sc_head_apply.1} parent=5 // pred_fallthru
        _
      %p174 = scmp.lt.s32.totalorder %s14, 2
      // Predicated region
      $region25: #{roberta_sc_head_apply.1} parent=5 // pred_check
        %p175 = pneg %p174
      $region26: #{roberta_sc_head_apply.1} parent=5 // pred_check_branch
        %177 = sbr.rel (%p175) target = $region28
      $region27: #{roberta_sc_head_apply.1} parent=5 // pred_region
        // Predicated region
        $region29: #{roberta_sc_head_apply.1} parent=27 // pred_check
          %p178 = pneg %p55
        $region30: #{roberta_sc_head_apply.1} parent=27 // pred_check_branch
          %180 = sbr.rel (%p178) target = $region32
        $region31: #{roberta_sc_head_apply.1} parent=27 // pred_region
          %s181 = sand.u32 %s45, 1
          %s182 = scalar_lea.sflag [#allocation4], %s181
          %s183 = sand.u32 %s45, 1
          %s184 = smul.addr %s183, 16
          %s185 = scalar_lea.vmem [#allocation3], %s184
          %s187 = ssub.s32 256, 256
          %188 = vsyncadd %s182, %s187
          %s189 = smul.addr %s14, 4
          %s190 = smul.addr %s189, 64
          %s191 = scalar_lea.hbm %s1, %s190
          %s192 = sshll.u32 %s185, 4
          %s193 = int_to_ptr.vmem [resolvable:$true] %s192
          %198 = dma.hbm_to_vmem [thread:$0]  %s191, 256, %s193, %s182, 64, 64, 4
        $region32: #{roberta_sc_head_apply.1} parent=27 // pred_fallthru
          _
        // Predicated region
        $region33: #{roberta_sc_head_apply.1} parent=27 // pred_check
          %p199 = pneg %p81
        $region34: #{roberta_sc_head_apply.1} parent=27 // pred_check_branch
          %201 = sbr.rel (%p199) target = $region36
        $region35: #{roberta_sc_head_apply.1} parent=27 // pred_region
          %p202 = scmp.lt.s32.totalorder %s14, 1
          %s203 = scalar_select %p202, %s14, 1
          %s204 = scalar_lea.vmem %s2, %s203
        $region36: #{roberta_sc_head_apply.1} parent=27 // pred_fallthru
          _
      $region28: #{roberta_sc_head_apply.1} parent=5 // pred_fallthru
        _
      %p205 = scmp.le.s32.totalorder 1, %s14
      %p206 = scmp.lt.s32.totalorder %s14, 3
      %p207 = pnand %p205, %p206
      %p208 = pneg %p207
      // Predicated region
      $region37: #{roberta_sc_head_apply.1} parent=5 // pred_check
        _
      $region38: #{roberta_sc_head_apply.1} parent=5 // pred_check_branch
        %210 = sbr.rel (%p207) target = $region40
      $region39: #{roberta_sc_head_apply.1} parent=5 // pred_region
        %s211 = ssub.s32 %s14, 1
        %s212 = sand.u32 %s48, 1
        %s213 = scalar_lea.sflag [#allocation4], %s212
        %s214 = sand.u32 %s48, 1
        %s215 = smul.addr %s214, 16
        %s216 = scalar_lea.vmem [#allocation3], %s215
        // Predicated region
        $region41: #{roberta_sc_head_apply.1} parent=39 // pred_check
          %p217 = pneg %p61
        $region42: #{roberta_sc_head_apply.1} parent=39 // pred_check_branch
          %219 = sbr.rel (%p217) target = $region44
        $region43: #{roberta_sc_head_apply.1} parent=39 // pred_region
          %220 = dma.done %s213, 256
        $region44: #{roberta_sc_head_apply.1} parent=39 // pred_fallthru
          _
        %p221 = pneg %p35
        %p222 = pneg %p32
        %s223 = sand.u32 %s48, 1
        %s224 = scalar_lea.sflag [#allocation4], %s223
        %s225 = sand.u32 %s48, 1
        %s226 = smul.addr %s225, 16
        %s227 = scalar_lea.vmem [#allocation3], %s226
        %p228 = pneg %p61
        %p229 = pneg %p58
        %p230 = scmp.lt.s32.totalorder %s19, 1
        %s231 = scalar_select %p230, %s19, 1
        %s232 = scalar_lea.vmem %s2, %s231
        %p233 = pneg %p87
        %p234 = pneg %p84
        %p235 = pneg %p108
        %p236 = pneg %p105
        %p237 = pneg %p129
        %p238 = pneg %p126
        %p239 = pneg %p150
        %p240 = pneg %p147
        %p241 = scmp.lt.s32.totalorder %s19, 1
        %s242 = scalar_select %p241, %s19, 1
        %s243 = scalar_lea.vmem %s2, %s242
        %p245 = scmp.eq.s32.totalorder %s19, 0
        // Predicated region
        $region45: #{roberta_sc_head_apply.1} parent=39 // pred_check
          %p246 = pneg %p245
        $region46: #{roberta_sc_head_apply.1} parent=39 // pred_check_branch
          %248 = sbr.rel (%p246) target = $region48
        $region47: #{roberta_sc_head_apply.1} parent=39 // pred_region
          %v249 = vld [vmem:[%s0] sm:$0xff]
          %vm250 = vcmask 261120
          %251 = vst.msk [vmem:[#allocation2] sm:$0xff] %vm250, %v249
        $region48: #{roberta_sc_head_apply.1} parent=39 // pred_fallthru
          _
        %v252 = vld [vmem:[#allocation2] sm:$0xff]
        %v253 = vpack.c.bf16 %v252, %v252
        %v254 = vld [vmem:[%s216] sm:$0xf]
        %v255 = vld [vmem:[%s216 + $0x4] sm:$0xf]
        %v256 = vld [vmem:[%s216 + $0x8] sm:$0xf]
        %v257 = vld [vmem:[%s216 + $0xc] sm:$0xf]
        %v258 = vld [vmem:[%s243] sm:$0x1]
        %v260 = vlaneseq
        %v261 = vshrl.u32 %v260, 7
        %v262 = vsub.s32 0, %v261
        %v263 = vrot.slane %v258, %v262
        %v269 = vunpack.c.l.b16 %v254
        %v270 = vunpack.c.l.b16 %v255
        %v271 = vunpack.c.l.b16 %v256
        %v272 = vunpack.c.l.b16 %v257
        %v273 = vpack.c.b16 %v270, %v269
        %v274 = vpack.c.b16 %v272, %v271
        %vm277 = vcmask 261120
        %v279 = vsel %vm277, %v253, 0
        %281 = vmatprep.subr.bf16.mxu0 0
        %282 = vmatpush1.bf16.msra.mxu0 %v273
        %283 = vmatprep.subr.bf16.mxu0 0
        %284 = vmatpush1.bf16.msra.mxu0 %v274
        %285 = vmatprep.subr.bf16.mxu0 0
        %286 = vmatpush1.bf16.msra.mxu0 0
        %287 = vmatprep.subr.bf16.mxu0 0
        %288 = vmatpush1.bf16.msra.mxu0 0
        %289 = vmatprep.subr.bf16.mxu0 0
        %290 = vmatpush1.bf16.msra.mxu0 0
        %291 = vmatprep.subr.bf16.mxu0 0
        %292 = vmatpush1.bf16.msra.mxu0 0
        %293 = vmatprep.subr.bf16.mxu0 0
        %294 = vmatpush1.bf16.msra.mxu0 0
        %295 = vmatprep.subr.bf16.mxu0 0
        %296 = vmatpush1.bf16.msra.mxu0 0
        %297 = vmatprep.subr.bf16.mxu0 0
        %298 = vmatpush1.bf16.msra.mxu0 0
        %299 = vmatprep.subr.bf16.mxu0 0
        %300 = vmatpush1.bf16.msra.mxu0 0
        %301 = vmatprep.subr.bf16.mxu0 0
        %302 = vmatpush1.bf16.msra.mxu0 0
        %303 = vmatprep.subr.bf16.mxu0 0
        %304 = vmatpush1.bf16.msra.mxu0 0
        %305 = vmatprep.subr.bf16.mxu0 0
        %306 = vmatpush1.bf16.msra.mxu0 0
        %307 = vmatprep.subr.bf16.mxu0 0
        %308 = vmatpush1.bf16.msra.mxu0 0
        %309 = vmatprep.subr.bf16.mxu0 0
        %310 = vmatpush1.bf16.msra.mxu0 0
        %311 = vmatprep.subr.bf16.mxu0 0
        %312 = vmatpush1.bf16.msra.mxu0 0
        %313 = vmatprep.mubr.bf16.mxu0 0
        %314 = vmatmul.mubr.bf16.gmra.mrb[0].mxu0 %v279
        %v315 = vpop.f32.mrb[0].mxu0
        %v316 = vadd.f32 %v263, %v315
        %v317 = vpop.f32.mrb[0].mxu0
        %v318 = vpop.f32.mrb[0].mxu0
        %v319 = vpop.f32.mrb[0].mxu0
        %320 = vdwg.mxu0
        %v321 = vtanh.pop %v316
        %322 = vst.msk [vmem:[#allocation2] sm:$0xff] %vm277, %v321
        %p323 = scmp.eq.s32.totalorder %s19, 1
        // Predicated region
        $region49: #{roberta_sc_head_apply.1} parent=39 // pred_check
          %p324 = pneg %p323
        $region50: #{roberta_sc_head_apply.1} parent=39 // pred_check_branch
          %326 = sbr.rel (%p324) target = $region52
        $region51: #{roberta_sc_head_apply.1} parent=39 // pred_region
          %v327 = vld [vmem:[#allocation2] sm:$0xff]
          %v328 = vpack.c.bf16 %v327, %v327
          %v329 = vld [vmem:[%s3] sm:$0xf]
          %v330 = vld [vmem:[%s3 + $0x4] sm:$0xf]
          %v331 = vld [vmem:[%s3 + $0x8] sm:$0xf]
          %v332 = vld [vmem:[%s3 + $0xc] sm:$0xf]
          %v333 = vld [vmem:[%s4] sm:$0x1]
          %v335 = vlaneseq
          %v336 = vshrl.u32 %v335, 7
          %v337 = vsub.s32 0, %v336
          %v338 = vrot.slane %v333, %v337
          %v344 = vunpack.c.l.b16 %v329
          %v345 = vunpack.c.l.b16 %v330
          %v346 = vunpack.c.l.b16 %v331
          %v347 = vunpack.c.l.b16 %v332
          %v348 = vpack.c.b16 %v345, %v344
          %v349 = vpack.c.b16 %v347, %v346
          %v353 = vsel %vm277, %v328, 0
          %355 = vmatprep.subr.bf16.mxu0 0
          %356 = vmatpush1.bf16.msra.mxu0 %v348
          %357 = vmatprep.subr.bf16.mxu0 0
          %358 = vmatpush1.bf16.msra.mxu0 %v349
          %359 = vmatprep.subr.bf16.mxu0 0
          %360 = vmatpush1.bf16.msra.mxu0 0
          %361 = vmatprep.subr.bf16.mxu0 0
          %362 = vmatpush1.bf16.msra.mxu0 0
          %363 = vmatprep.subr.bf16.mxu0 0
          %364 = vmatpush1.bf16.msra.mxu0 0
          %365 = vmatprep.subr.bf16.mxu0 0
          %366 = vmatpush1.bf16.msra.mxu0 0
          %367 = vmatprep.subr.bf16.mxu0 0
          %368 = vmatpush1.bf16.msra.mxu0 0
          %369 = vmatprep.subr.bf16.mxu0 0
          %370 = vmatpush1.bf16.msra.mxu0 0
          %371 = vmatprep.subr.bf16.mxu0 0
          %372 = vmatpush1.bf16.msra.mxu0 0
          %373 = vmatprep.subr.bf16.mxu0 0
          %374 = vmatpush1.bf16.msra.mxu0 0
          %375 = vmatprep.subr.bf16.mxu0 0
          %376 = vmatpush1.bf16.msra.mxu0 0
          %377 = vmatprep.subr.bf16.mxu0 0
          %378 = vmatpush1.bf16.msra.mxu0 0
          %379 = vmatprep.subr.bf16.mxu0 0
          %380 = vmatpush1.bf16.msra.mxu0 0
          %381 = vmatprep.subr.bf16.mxu0 0
          %382 = vmatpush1.bf16.msra.mxu0 0
          %383 = vmatprep.subr.bf16.mxu0 0
          %384 = vmatpush1.bf16.msra.mxu0 0
          %385 = vmatprep.subr.bf16.mxu0 0
          %386 = vmatpush1.bf16.msra.mxu0 0
          %387 = vmatprep.mubr.bf16.mxu0 0
          %388 = vmatmul.mubr.bf16.gmra.mrb[0].mxu0 %v353
          %v389 = vpop.f32.mrb[0].mxu0
          %v390 = vadd.f32 %v338, %v389
          %v391 = vpop.f32.mrb[0].mxu0
          %v392 = vpop.f32.mrb[0].mxu0
          %v393 = vpop.f32.mrb[0].mxu0
          %394 = vdwg.mxu0
          %395 = vst [vmem:[%s5] sm:$0xff] %v390
        $region52: #{roberta_sc_head_apply.1} parent=39 // pred_fallthru
          _
        // Predicated region
        $region53: #{roberta_sc_head_apply.1} parent=39 // pred_check
          %p396 = pneg %p147
        $region54: #{roberta_sc_head_apply.1} parent=39 // pred_check_branch
          %398 = sbr.rel (%p396) target = $region56
        $region55: #{roberta_sc_head_apply.1} parent=39 // pred_region
          _
        $region56: #{roberta_sc_head_apply.1} parent=39 // pred_fallthru
          _
        // Predicated region
        $region57: #{roberta_sc_head_apply.1} parent=39 // pred_check
          %p399 = pneg %p147
        $region58: #{roberta_sc_head_apply.1} parent=39 // pred_check_branch
          %401 = sbr.rel (%p399) target = $region60
        $region59: #{roberta_sc_head_apply.1} parent=39 // pred_region
          _
        $region60: #{roberta_sc_head_apply.1} parent=39 // pred_fallthru
          _
      $region40: #{roberta_sc_head_apply.1} parent=5 // pred_fallthru
        _
      %p402 = scmp.le.s32.totalorder 2, %s14
      // Predicated region
      $region61: #{roberta_sc_head_apply.1} parent=5 // pred_check
        %p403 = pneg %p402
      $region62: #{roberta_sc_head_apply.1} parent=5 // pred_check_branch
        %405 = sbr.rel (%p403) target = $region64
      $region63: #{roberta_sc_head_apply.1} parent=5 // pred_region
        %s406 = ssub.s32 %s14, 2
      $region64: #{roberta_sc_head_apply.1} parent=5 // pred_fallthru
        _
    $region6: #{roberta_sc_head_apply.1} parent=1 // loop_footer
      %s18 = sadd.s32 1, %s14
    $region7: #{roberta_sc_head_apply.1} parent=1 // loop_footer_branch
      %13 = sbr.rel target = $region3
    $region8: #{roberta_sc_head_apply.1} parent=1 // loop_exit
      _
    %407 = vsyncpa [#allocation4], 1
    %s408 = scalar_lea.sflag [#allocation4], 1
    %409 = vsyncpa %s408, 1

</llo_original>
